<compile_context>
chip_gen: v5e
topology: v5e:2x2
jax: 0.10.0
libtpu: 0.0.40
codegen_flags: <defaults>
</compile_context>

<pallas_src>
import numpy as np
import jax
import jax.numpy as jnp
from jax import lax
from jax.experimental import pallas as pl
from jax.experimental.pallas import tpu as pltpu

_LANE = 128
_SUBLANE = 8
_TB_MAX = 128    # max bags per grid step
_TK_MAX = 1024   # max table rows (contraction chunk) per grid step (bf16)


def _round_up(x, m):
    return ((x + m - 1) // m) * m


def _single_buffered_spec(shape, index_map):
    """Spec for a grid-invariant operand: single-buffer it (no overlap benefit
    from double buffering since the block never changes). Falls back to the
    default spec if this Pallas version does not accept pipeline_mode."""
    try:
        return pl.BlockSpec(shape, index_map, pipeline_mode=pl.Buffered(1))
    except Exception:
        return pl.BlockSpec(shape, index_map)


def _weighted_scatter(idx, w, tk, k):
    """S[b, e_local] = sum_j w[b, j] * (idx[b, j] == k*tk + e_local), f32.

    Built in f32 (exact for the padded-slot w==0 trick and duplicate indices),
    cast to bf16 by the caller right before the MXU matmul.
    NOTE(perf): on v6e/v7x the where/add part could run in bf16 vregs (2x VALU
    throughput); kept f32 here so the same kernel is also optimal on v5e.
    """
    tb, max_bag = idx.shape
    e_iota = lax.broadcasted_iota(jnp.int32, (tb, tk), 1) + k * tk
    s = jnp.zeros((tb, tk), jnp.float32)
    for j in range(max_bag):
        s = s + jnp.where(e_iota == idx[:, j:j + 1], w[:, j:j + 1], 0.0)
    return s


def _bag_proj_kernel(idx_ref, w_ref, table_ref, projT_ref, out_ref, acc_ref):
    # idx_ref   : VMEM (TB, max_bag) int32   bag member indices (padded slots -> w=0)
    # w_ref     : VMEM (TB, max_bag) f32     per-sample weights
    # table_ref : VMEM (TK, D_pad)   bf16    one NE chunk of the embedding table
    # projT_ref : VMEM (D_pad, BD_pad) bf16  W^T of the projection
    # out_ref   : VMEM (TB, BD_pad)  f32
    # acc_ref   : VMEM (TB, D_pad)   f32     resident bag-sum accumulator
    k = pl.program_id(1)

    @pl.when(k == 0)
    def _():
        acc_ref[...] = jnp.zeros_like(acc_ref)

    tk = table_ref.shape[0]
    s = _weighted_scatter(idx_ref[...], w_ref[...], tk, k)
    acc_ref[...] += jnp.dot(s.astype(jnp.bfloat16), table_ref[...],
                            preferred_element_type=jnp.float32)

    @pl.when(k == pl.num_programs(1) - 1)
    def _():
        out_ref[...] = jnp.dot(acc_ref[...].astype(jnp.bfloat16), projT_ref[...],
                               preferred_element_type=jnp.float32)


def _bag_identity_kernel(idx_ref, w_ref, table_ref, out_ref):
    # embedding_dim == base_dim -> nn.Identity(): accumulate straight into the
    # (resident) output block, no projection matmul, no extra scratch.
    k = pl.program_id(1)

    @pl.when(k == 0)
    def _():
        out_ref[...] = jnp.zeros_like(out_ref)

    tk = table_ref.shape[0]
    s = _weighted_scatter(idx_ref[...], w_ref[...], tk, k)
    out_ref[...] += jnp.dot(s.astype(jnp.bfloat16), table_ref[...],
                            preferred_element_type=jnp.float32)


def _to_dense_bags(indices, offsets, per_sample_weights):
    """Repack ragged (indices, offsets) bags into dense padded [B, max_bag] arrays.

    max_bag is quantized to a power of two (>= 4) so the pallas_call signature is
    stable across batches with similar bag-length distributions.
    """
    if offsets is None:
        # torch EmbeddingBag 2-D path: each row of `indices` is one bag.
        idx2d = np.asarray(indices, np.int32)
        B, L = idx2d.shape
        max_bag = max(4, pl.next_power_of_2(max(L, 1)))
        idx_dense = np.zeros((B, max_bag), np.int32)
        w_dense = np.zeros((B, max_bag), np.float32)
        idx_dense[:, :L] = idx2d
        if per_sample_weights is None:
            w_dense[:, :L] = 1.0
        else:
            w_dense[:, :L] = np.asarray(per_sample_weights, np.float32).reshape(B, L)
        return idx_dense, w_dense, B

    idx_np = np.asarray(indices, np.int64)
    off_np = np.asarray(offsets, np.int64)
    total = idx_np.shape[0]
    B = off_np.shape[0]
    ends = np.append(off_np[1:], total)
    lengths = (ends - off_np).astype(np.int64)
    longest = max(int(lengths.max()) if B > 0 else 0, 1)
    max_bag = max(4, pl.next_power_of_2(longest))
    # TODO(synk): for heavily skewed bag-length distributions, bucket bags by
    # length (one pallas_call per bucket) instead of padding every bag to max_bag.

    psw = (np.ones(total, np.float32) if per_sample_weights is None
           else np.asarray(per_sample_weights, np.float32))

    seg = np.repeat(np.arange(B), lengths)
    pos = np.arange(total) - np.repeat(off_np, lengths)
    idx_dense = np.zeros((B, max_bag), np.int32)
    w_dense = np.zeros((B, max_bag), np.float32)
    idx_dense[seg, pos] = idx_np
    w_dense[seg, pos] = psw
    return idx_dense, w_dense, B


class PrEmbeddingBagPallas:
    """Pallas port of PrEmbeddingBag (forward pass only)."""

    def __init__(self, num_embeddings, embedding_dim, base_dim, key):
        k_emb, k_proj = jax.random.split(key)
        # xavier_uniform on (num_embeddings, embedding_dim)
        a = float(np.sqrt(6.0 / (num_embeddings + embedding_dim)))
        weight = jax.random.uniform(
            k_emb, (num_embeddings, embedding_dim), jnp.float32, -a, a)

        self.num_embeddings = num_embeddings
        self.embedding_dim = embedding_dim
        self.base_dim = base_dim
        self.weight = weight  # unpadded f32 table (reference / inspection)

        # lane-dense zero padding; NE padded to a multiple of the contraction
        # chunk TK so the reduction grid axis tiles exactly.
        ne_pad0 = _round_up(max(num_embeddings, 1), _LANE)
        self._tk = min(ne_pad0, _TK_MAX)
        self._ne_pad = _round_up(ne_pad0, self._tk)
        self._d_pad = _round_up(embedding_dim, _LANE)
        # bf16 table: halves HBM/VMEM bytes and runs the MXU in bf16 mode
        # (documented precision tradeoff; the one-hot gather itself stays exact).
        self.table_padded = (
            jnp.zeros((self._ne_pad, self._d_pad), jnp.bfloat16)
            .at[:num_embeddings, :embedding_dim]
            .set(weight.astype(jnp.bfloat16)))

        if embedding_dim < base_dim:
            b = float(np.sqrt(6.0 / (base_dim + embedding_dim)))
            proj_w = jax.random.uniform(
                k_proj, (base_dim, embedding_dim), jnp.float32, -b, b)
            self.proj_weight = proj_w                     # nn.Linear weight (bd, d)
            self._bd_pad = _round_up(base_dim, _LANE)
            self.projT_padded = (
                jnp.zeros((self._d_pad, self._bd_pad), jnp.bfloat16)
                .at[:embedding_dim, :base_dim]
                .set(proj_w.T.astype(jnp.bfloat16)))
            self._has_proj = True
        elif embedding_dim == base_dim:
            self.proj_weight = None                       # nn.Identity(): skip matmul
            self.projT_padded = None
            self._bd_pad = self._d_pad
            self._has_proj = False
        else:
            raise ValueError("Embedding dim " + str(embedding_dim)
                             + " > base dim " + str(base_dim))

    def __call__(self, input, offsets=None, per_sample_weights=None):
        idx_dense, w_dense, num_bags = _to_dense_bags(
            input, offsets, per_sample_weights)
        max_bag = idx_dense.shape[1]

        # Bag tile: split medium/large batches into >= 2 tiles so the "parallel"
        # bag axis can shard across both v7x TensorCores; tiny batches get one
        # minimal tile.
        if num_bags > _SUBLANE:
            tb = min(_TB_MAX, _round_up((num_bags + 1) // 2, _SUBLANE))
        else:
            tb = _SUBLANE
        num_bags_p = _round_up(num_bags, tb)
        pad = num_bags_p - num_bags
        if pad:
            idx_dense = np.concatenate(
                [idx_dense, np.zeros((pad, max_bag), np.int32)], axis=0)
            w_dense = np.concatenate(
                [w_dense, np.zeros((pad, max_bag), np.float32)], axis=0)

        idx_dense = jnp.asarray(idx_dense, jnp.int32)
        w_dense = jnp.asarray(w_dense, jnp.float32)

        ne_p, d_p, bd_p, tk = self._ne_pad, self._d_pad, self._bd_pad, self._tk
        nk = ne_p // tk
        grid = (num_bags_p // tb, nk)   # bags (parallel) x NE chunks (arbitrary, last)

        # Generation-aware VMEM budget with headroom (review item: no fixed clamp).
        try:
            vmem_cap = int(pltpu.get_tpu_info().vmem_capacity_bytes)
        except Exception:
            vmem_cap = 64 << 20  # conservative: v7x per-TC capacity
        table_bufs = 1 if nk == 1 else 2           # single-buffer a constant table
        need = (tk * d_p * 2 * table_bufs                      # bf16 table chunk(s)
                + (d_p * bd_p * 2 if self._has_proj else 0)    # bf16 W^T (Buffered(1))
                + 2 * tb * max_bag * (4 + 4)                   # idx + weights tiles
                + 2 * tb * bd_p * 4                            # output tile
                + tb * d_p * 4                                 # f32 accumulator
                + tb * tk * (4 + 2)                            # live S (f32 + bf16)
                + tb * d_p * 4)                                # live matmul result
        vmem_limit = int(min(max(2 * need, 16 << 20), vmem_cap - (8 << 20)))

        idx_spec = pl.BlockSpec((tb, max_bag), lambda t, k: (t, 0))
        w_spec = pl.BlockSpec((tb, max_bag), lambda t, k: (t, 0))
        if nk == 1:
            table_spec = _single_buffered_spec((tk, d_p), lambda t, k: (0, 0))
        else:
            table_spec = pl.BlockSpec((tk, d_p), lambda t, k: (k, 0))
        out_spec = pl.BlockSpec((tb, bd_p), lambda t, k: (t, 0))
        cparams = pltpu.CompilerParams(
            dimension_semantics=("parallel", "arbitrary"),
            vmem_limit_bytes=vmem_limit)

        if self._has_proj:
            projT_spec = _single_buffered_spec((d_p, bd_p), lambda t, k: (0, 0))
            out = pl.pallas_call(
                _bag_proj_kernel,
                out_shape=jax.ShapeDtypeStruct((num_bags_p, bd_p), jnp.float32),
                grid_spec=pltpu.PrefetchScalarGridSpec(
                    num_scalar_prefetch=0,
                    grid=grid,
                    in_specs=[idx_spec, w_spec, table_spec, projT_spec],
                    out_specs=out_spec,
                    scratch_shapes=[pltpu.VMEM((tb, d_p), jnp.float32)]),
                compiler_params=cparams,
            )(idx_dense, w_dense, self.table_padded, self.projT_padded)
        else:
            out = pl.pallas_call(
                _bag_identity_kernel,
                out_shape=jax.ShapeDtypeStruct((num_bags_p, bd_p), jnp.float32),
                grid_spec=pltpu.PrefetchScalarGridSpec(
                    num_scalar_prefetch=0,
                    grid=grid,
                    in_specs=[idx_spec, w_spec, table_spec],
                    out_specs=out_spec),
                compiler_params=cparams,
            )(idx_dense, w_dense, self.table_padded)

        return out[:num_bags, :self.base_dim]


if __name__ == "__main__":
    key = jax.random.PRNGKey(0)
    k_param, k_idx, k_w, k_param2, k_idx2 = jax.random.split(key, 5)

    # ---- projection path: embedding_dim < base_dim -------------------------
    NUM_EMB, EMB_DIM, BASE_DIM = 64, 32, 64
    mod = PrEmbeddingBagPallas(NUM_EMB, EMB_DIM, BASE_DIM, k_param)

    # 6 bags over 14 indices; bag 1 is empty (torch semantics: empty bag -> zeros)
    offsets = jnp.array([0, 3, 3, 7, 9, 12], dtype=jnp.int32)
    indices = jax.random.randint(k_idx, (14,), 0, NUM_EMB, dtype=jnp.int32)
    psw = jax.random.uniform(k_w, (14,), jnp.float32, 0.5, 1.5)

    out = jax.block_until_ready(mod(indices, offsets, per_sample_weights=psw))

    # numpy reference: EmbeddingBag(mode='sum') + Linear(bias=False), evaluated
    # with the same bf16-quantized parameters the kernel uses.
    tbl_q = np.asarray(mod.table_padded[:NUM_EMB, :EMB_DIM].astype(jnp.float32))
    prjT_q = np.asarray(mod.projT_padded[:EMB_DIM, :BASE_DIM].astype(jnp.float32))
    idx_np = np.asarray(indices)
    off_np = np.asarray(offsets)
    psw_np = np.asarray(psw)
    ends = np.append(off_np[1:], idx_np.shape[0])
    seg = np.repeat(np.arange(off_np.shape[0]), ends - off_np)
    gathered = tbl_q[idx_np] * psw_np[:, None]
    bags = np.zeros((off_np.shape[0], EMB_DIM), np.float32)
    np.add.at(bags, seg, gathered)
    ref = bags @ prjT_q

    assert out.shape == (6, BASE_DIM), out.shape
    assert np.allclose(np.asarray(out), ref, rtol=2e-2, atol=2e-2), \
        float(np.abs(np.asarray(out) - ref).max())

    # ---- identity path: embedding_dim == base_dim (projection skipped) -----
    NUM_EMB2, DIM2 = 48, 32
    mod2 = PrEmbeddingBagPallas(NUM_EMB2, DIM2, DIM2, k_param2)
    idx2 = jax.random.randint(k_idx2, (10,), 0, NUM_EMB2, dtype=jnp.int32)
    off2 = jnp.array([0, 4, 7], dtype=jnp.int32)
    out2 = jax.block_until_ready(mod2(idx2, off2))

    tbl2_q = np.asarray(mod2.table_padded[:NUM_EMB2, :DIM2].astype(jnp.float32))
    off2_np = np.asarray(off2)
    ends2 = np.append(off2_np[1:], 10)
    seg2 = np.repeat(np.arange(3), ends2 - off2_np)
    bags2 = np.zeros((3, DIM2), np.float32)
    np.add.at(bags2, seg2, tbl2_q[np.asarray(idx2)])

    assert out2.shape == (3, DIM2), out2.shape
    assert np.allclose(np.asarray(out2), bags2, rtol=1e-2, atol=1e-2), \
        float(np.abs(np.asarray(out2) - bags2).max())

    print("KERNEL_OK")
</pallas_src>

<mosaic_0001>
module attributes {stable_mosaic.version = 11 : i64} {
  func.func @_bag_proj_kernel(%arg0: i32, %arg1: i32, %arg2: memref<8x4xi32, #tpu.memory_space<vmem>>, %arg3: memref<8x4xf32, #tpu.memory_space<vmem>>, %arg4: memref<128x128xbf16, #tpu.memory_space<vmem>>, %arg5: memref<128x128xbf16, #tpu.memory_space<vmem>>, %arg6: memref<8x128xf32, #tpu.memory_space<vmem>>, %arg7: memref<8x128xf32, #tpu.memory_space<vmem>>) attributes {dimension_semantics = [#tpu.dimension_semantics<parallel>, #tpu.dimension_semantics<arbitrary>], iteration_bounds = array<i64: 1, 1>, scalar_prefetch = 0 : i64, scratch_operands = 1 : i64, tpu.core_type = #tpu.core_type<tc>, window_params = [{transform_indices = @transform_0, window_bounds = array<i64: 8, 4>}, {transform_indices = @transform_1, window_bounds = array<i64: 8, 4>}, {pipeline_mode = #tpu.pipeline_mode<synchronous>, transform_indices = @transform_2, window_bounds = array<i64: 128, 128>}, {pipeline_mode = #tpu.pipeline_mode<synchronous>, transform_indices = @transform_3, window_bounds = array<i64: 128, 128>}, {transform_indices = @transform_4, window_bounds = array<i64: 8, 128>}]} {
    %c0_i32 = arith.constant 0 : i32
    %0 = arith.cmpi eq, %arg1, %c0_i32 : i32
    %1 = arith.extui %0 : i1 to i32
    %c0_i32_0 = arith.constant 0 : i32
    %2 = arith.cmpi ne, %1, %c0_i32_0 : i32
    scf.if %2 {
      %cst_17 = arith.constant 0.000000e+00 : f32
      %55 = vector.broadcast %cst_17 : f32 to vector<8x128xf32>
      %c0_18 = arith.constant 0 : index
      %c0_19 = arith.constant 0 : index
      %56 = vector.load %arg7[%c0_18, %c0_19] : memref<8x128xf32, #tpu.memory_space<vmem>>, vector<8x128xf32>
      tpu.vector_store %arg7[%c0_18, %c0_19], %55 {strides = array<i32>} : memref<8x128xf32, #tpu.memory_space<vmem>>, vector<8x128xf32>,
    } else {
    }
    %c0 = arith.constant 0 : index
    %c0_1 = arith.constant 0 : index
    %3 = vector.load %arg2[%c0, %c0_1] : memref<8x4xi32, #tpu.memory_space<vmem>>, vector<8x4xi32>
    %c0_2 = arith.constant 0 : index
    %c0_3 = arith.constant 0 : index
    %4 = vector.load %arg3[%c0_2, %c0_3] : memref<8x4xf32, #tpu.memory_space<vmem>>, vector<8x4xf32>
    %5 = tpu.iota {dimensions = array<i32: 1>} : vector<8x128xi32>
    %c128_i32 = arith.constant 128 : i32
    %6 = arith.muli %arg1, %c128_i32 : i32
    %7 = vector.broadcast %6 : i32 to vector<8x128xi32>
    %8 = arith.addi %5, %7 : vector<8x128xi32>
    %cst = arith.constant 0.000000e+00 : f32
    %9 = vector.broadcast %cst : f32 to vector<8x128xf32>
    %10 = vector.extract_strided_slice %3 {offsets = [0, 0], sizes = [8, 1], strides = [1, 1]} : vector<8x4xi32> to vector<8x1xi32>
    %11 = vector.broadcast %10 : vector<8x1xi32> to vector<8x128xi32>
    %12 = arith.cmpi eq, %8, %11 : vector<8x128xi32>
    %13 = vector.extract_strided_slice %4 {offsets = [0, 0], sizes = [8, 1], strides = [1, 1]} : vector<8x4xf32> to vector<8x1xf32>
    %cst_4 = arith.constant 0.000000e+00 : f32
    %14 = vector.shape_cast %13 : vector<8x1xf32> to vector<8x1xf32>
    %15 = vector.broadcast %14 : vector<8x1xf32> to vector<8x128xf32>
    %16 = vector.broadcast %cst_4 : f32 to vector<8x128xf32>
    %17 = arith.select %12, %15, %16 : vector<8x128xi1>, vector<8x128xf32>
    %18 = arith.addf %9, %17 : vector<8x128xf32>
    %19 = vector.extract_strided_slice %3 {offsets = [0, 1], sizes = [8, 1], strides = [1, 1]} : vector<8x4xi32> to vector<8x1xi32>
    %20 = vector.broadcast %19 : vector<8x1xi32> to vector<8x128xi32>
    %21 = arith.cmpi eq, %8, %20 : vector<8x128xi32>
    %22 = vector.extract_strided_slice %4 {offsets = [0, 1], sizes = [8, 1], strides = [1, 1]} : vector<8x4xf32> to vector<8x1xf32>
    %cst_5 = arith.constant 0.000000e+00 : f32
    %23 = vector.shape_cast %22 : vector<8x1xf32> to vector<8x1xf32>
    %24 = vector.broadcast %23 : vector<8x1xf32> to vector<8x128xf32>
    %25 = vector.broadcast %cst_5 : f32 to vector<8x128xf32>
    %26 = arith.select %21, %24, %25 : vector<8x128xi1>, vector<8x128xf32>
    %27 = arith.addf %18, %26 : vector<8x128xf32>
    %28 = vector.extract_strided_slice %3 {offsets = [0, 2], sizes = [8, 1], strides = [1, 1]} : vector<8x4xi32> to vector<8x1xi32>
    %29 = vector.broadcast %28 : vector<8x1xi32> to vector<8x128xi32>
    %30 = arith.cmpi eq, %8, %29 : vector<8x128xi32>
    %31 = vector.extract_strided_slice %4 {offsets = [0, 2], sizes = [8, 1], strides = [1, 1]} : vector<8x4xf32> to vector<8x1xf32>
    %cst_6 = arith.constant 0.000000e+00 : f32
    %32 = vector.shape_cast %31 : vector<8x1xf32> to vector<8x1xf32>
    %33 = vector.broadcast %32 : vector<8x1xf32> to vector<8x128xf32>
    %34 = vector.broadcast %cst_6 : f32 to vector<8x128xf32>
    %35 = arith.select %30, %33, %34 : vector<8x128xi1>, vector<8x128xf32>
    %36 = arith.addf %27, %35 : vector<8x128xf32>
    %37 = vector.extract_strided_slice %3 {offsets = [0, 3], sizes = [8, 1], strides = [1, 1]} : vector<8x4xi32> to vector<8x1xi32>
    %38 = vector.broadcast %37 : vector<8x1xi32> to vector<8x128xi32>
    %39 = arith.cmpi eq, %8, %38 : vector<8x128xi32>
    %40 = vector.extract_strided_slice %4 {offsets = [0, 3], sizes = [8, 1], strides = [1, 1]} : vector<8x4xf32> to vector<8x1xf32>
    %cst_7 = arith.constant 0.000000e+00 : f32
    %41 = vector.shape_cast %40 : vector<8x1xf32> to vector<8x1xf32>
    %42 = vector.broadcast %41 : vector<8x1xf32> to vector<8x128xf32>
    %43 = vector.broadcast %cst_7 : f32 to vector<8x128xf32>
    %44 = arith.select %39, %42, %43 : vector<8x128xi1>, vector<8x128xf32>
    %45 = arith.addf %36, %44 : vector<8x128xf32>
    %c0_8 = arith.constant 0 : index
    %c0_9 = arith.constant 0 : index
    %46 = vector.load %arg7[%c0_8, %c0_9] : memref<8x128xf32, #tpu.memory_space<vmem>>, vector<8x128xf32>
    %47 = arith.truncf %45 : vector<8x128xf32> to vector<8x128xbf16>
    %c0_10 = arith.constant 0 : index
    %c0_11 = arith.constant 0 : index
    %48 = vector.load %arg4[%c0_10, %c0_11] : memref<128x128xbf16, #tpu.memory_space<vmem>>, vector<128x128xbf16>
    %cst_12 = arith.constant dense<0.000000e+00> : vector<8x128xf32>
    %49 = tpu.matmul %47, %48, %cst_12 {dimension_numbers = #tpu.dot_dimension_numbers<[1], [0], [0], [1], [0, 0, 1, 1], [], []>} : vector<8x128xbf16>, vector<128x128xbf16>, vector<8x128xf32> -> vector<8x128xf32>
    %50 = arith.addf %46, %49 : vector<8x128xf32>
    %c0_13 = arith.constant 0 : index
    %c0_14 = arith.constant 0 : index
    %51 = vector.load %arg7[%c0_13, %c0_14] : memref<8x128xf32, #tpu.memory_space<vmem>>, vector<8x128xf32>
    tpu.vector_store %arg7[%c0_13, %c0_14], %50 {strides = array<i32>} : memref<8x128xf32, #tpu.memory_space<vmem>>, vector<8x128xf32>,
    %c0_i32_15 = arith.constant 0 : i32
    %52 = arith.cmpi eq, %arg1, %c0_i32_15 : i32
    %53 = arith.extui %52 : i1 to i32
    %c0_i32_16 = arith.constant 0 : i32
    %54 = arith.cmpi ne, %53, %c0_i32_16 : i32
    scf.if %54 {
      %c0_17 = arith.constant 0 : index
      %c0_18 = arith.constant 0 : index
      %55 = vector.load %arg7[%c0_17, %c0_18] : memref<8x128xf32, #tpu.memory_space<vmem>>, vector<8x128xf32>
      %56 = arith.truncf %55 : vector<8x128xf32> to vector<8x128xbf16>
      %c0_19 = arith.constant 0 : index
      %c0_20 = arith.constant 0 : index
      %57 = vector.load %arg5[%c0_19, %c0_20] : memref<128x128xbf16, #tpu.memory_space<vmem>>, vector<128x128xbf16>
      %cst_21 = arith.constant dense<0.000000e+00> : vector<8x128xf32>
      %58 = tpu.matmul %56, %57, %cst_21 {dimension_numbers = #tpu.dot_dimension_numbers<[1], [0], [0], [1], [0, 0, 1, 1], [], []>} : vector<8x128xbf16>, vector<128x128xbf16>, vector<8x128xf32> -> vector<8x128xf32>
      %c0_22 = arith.constant 0 : index
      %c0_23 = arith.constant 0 : index
      %59 = vector.load %arg6[%c0_22, %c0_23] : memref<8x128xf32, #tpu.memory_space<vmem>>, vector<8x128xf32>
      tpu.vector_store %arg6[%c0_22, %c0_23], %58 {strides = array<i32>} : memref<8x128xf32, #tpu.memory_space<vmem>>, vector<8x128xf32>,
    } else {
    }
    return
  }
  func.func @transform_0(%arg0: i32, %arg1: i32) -> (i32, i32) {
    %c0_i32 = arith.constant 0 : i32
    %c0_i32_0 = arith.constant 0 : i32
    return %arg0, %c0_i32 : i32, i32
  }
  func.func @transform_1(%arg0: i32, %arg1: i32) -> (i32, i32) {
    %c0_i32 = arith.constant 0 : i32
    %c0_i32_0 = arith.constant 0 : i32
    return %arg0, %c0_i32 : i32, i32
  }
  func.func @transform_2(%arg0: i32, %arg1: i32) -> (i32, i32) {
    %c0_i32 = arith.constant 0 : i32
    %c0_i32_0 = arith.constant 0 : i32
    %c0_i32_1 = arith.constant 0 : i32
    return %c0_i32, %c0_i32_0 : i32, i32
  }
  func.func @transform_3(%arg0: i32, %arg1: i32) -> (i32, i32) {
    %c0_i32 = arith.constant 0 : i32
    %c0_i32_0 = arith.constant 0 : i32
    %c0_i32_1 = arith.constant 0 : i32
    return %c0_i32, %c0_i32_0 : i32, i32
  }
  func.func @transform_4(%arg0: i32, %arg1: i32) -> (i32, i32) {
    %c0_i32 = arith.constant 0 : i32
    %c0_i32_0 = arith.constant 0 : i32
    return %arg0, %c0_i32 : i32, i32
  }
}

</mosaic_0001>

<llo_original>
// kernel: tpu_custom_call.1
$region0: #{tpu_custom_call.1}
  #allocation0 [shape = 'u32[]', space=smem, size = 0x4, offset = 0x4, fixed_abs, tag = 'smem constant byte address 0x4 - core index']
  #allocation1 [shape = 'u32[72,128]{1,0:T(1,128)}', space=vmem, size = 0x9000, scoped, tag = 'internal scratch']
  #allocation2 [shape = 'f32[8,128]{1,0:T(8,128)}', space=vmem, size = 0x1000, scoped, tag = 'scratch operand']
  %s0 = inlined_call_operand.vmem [shape: s32[8,4], index: 0, kind: input, shape index: {}]
  %s1 = inlined_call_operand.vmem [shape: f32[8,4], index: 1, kind: input, shape index: {}]
  %s2 = inlined_call_operand.hbm [shape: bf16[128,128], index: 2, kind: input, shape index: {}]
  %s3 = inlined_call_operand.hbm [shape: bf16[128,128], index: 3, kind: input, shape index: {}]
  %s4 = inlined_call_operand.hbm [shape: f32[8,128], index: 4, kind: output, shape index: {}]
  %s5 = sld [smem:[#allocation0]]
  $region42: #{tpu_custom_call.1} parent=0
    _
  %s7 = ssub.s32 1, %s5
  %s8 = scalar_select 0, %s7, %s5
  $region1: #{tpu_custom_call.1} parent=0
    #allocation3 [shape = 'u8[32768]{0}', space=vmem, size = 0x8000, scoped, tag = 'input window, operand 2, single buffered']
    #allocation4 [shape = 's32[1]{0}', space=sflag, size = 0x4, scoped, tag = 'scoped memory for tpu_custom_call.1']
    #allocation5 [shape = 's32[1]{0}', space=sflag, size = 0x4, scoped, tag = 'scoped memory for tpu_custom_call.1']
    #allocation6 [shape = 'u8[32768]{0}', space=vmem, size = 0x8000, scoped, tag = 'input window, operand 3, single buffered']
    #allocation7 [shape = 's32[1]{0}', space=sflag, size = 0x4, scoped, tag = 'scoped memory for tpu_custom_call.1']
    #allocation8 [shape = 'u8[4096]{0}', space=vmem, size = 0x1000, scoped, tag = 'output window, operand 0, single buffered']
    %9 = vsyncpa [#allocation4], 0
    %10 = vsyncpa [#allocation7], 0
    %11 = vsyncpa [#allocation5], 0
    // Predicated region
    $region2: #{tpu_custom_call.1} parent=1 // pred_check
      _
    $region3: #{tpu_custom_call.1} parent=1 // pred_check_branch
      %13 = sbr.rel (0) target = $region5
    $region4: #{tpu_custom_call.1} parent=1 // pred_region
      _
    $region5: #{tpu_custom_call.1} parent=1 // pred_fallthru
      _
    // Predicated region
    $region6: #{tpu_custom_call.1} parent=1 // pred_check
      _
    $region7: #{tpu_custom_call.1} parent=1 // pred_check_branch
      %15 = sbr.rel (0) target = $region9
    $region8: #{tpu_custom_call.1} parent=1 // pred_region
      _
    $region9: #{tpu_custom_call.1} parent=1 // pred_fallthru
      _
    // Predicated region
    $region10: #{tpu_custom_call.1} parent=1 // pred_check
      _
    $region11: #{tpu_custom_call.1} parent=1 // pred_check_branch
      %17 = sbr.rel (0) target = $region13
    $region12: #{tpu_custom_call.1} parent=1 // pred_region
      %19 = vsyncadd [#allocation4], 0
      %s20 = sshll.u32 %s2, 4
      %s21 = int_to_ptr.hbm [resolvable:$true] %s20
      %s22 = sshll.u32 [#allocation3], 4
      %s23 = int_to_ptr.vmem [resolvable:$true] %s22
      %28 = dma.hbm_to_vmem [thread:$0]  %s21, 1024, %s23, [#allocation4], 64, 64, 4
    $region13: #{tpu_custom_call.1} parent=1 // pred_fallthru
      _
    // Predicated region
    $region14: #{tpu_custom_call.1} parent=1 // pred_check
      _
    $region15: #{tpu_custom_call.1} parent=1 // pred_check_branch
      %30 = sbr.rel (0) target = $region17
    $region16: #{tpu_custom_call.1} parent=1 // pred_region
      %32 = vsyncadd [#allocation7], 0
      %s33 = sshll.u32 %s3, 4
      %s34 = int_to_ptr.hbm [resolvable:$true] %s33
      %s35 = sshll.u32 [#allocation6], 4
      %s36 = int_to_ptr.vmem [resolvable:$true] %s35
      %41 = dma.hbm_to_vmem [thread:$0]  %s34, 1024, %s36, [#allocation7], 64, 64, 4
    $region17: #{tpu_custom_call.1} parent=1 // pred_fallthru
      _
    // Predicated region
    $region18: #{tpu_custom_call.1} parent=1 // pred_check
      _
    $region19: #{tpu_custom_call.1} parent=1 // pred_check_branch
      %43 = sbr.rel (0) target = $region21
    $region20: #{tpu_custom_call.1} parent=1 // pred_region
      %45 = dma.done [#allocation4], 1024
    $region21: #{tpu_custom_call.1} parent=1 // pred_fallthru
      _
    // Predicated region
    $region22: #{tpu_custom_call.1} parent=1 // pred_check
      _
    $region23: #{tpu_custom_call.1} parent=1 // pred_check_branch
      %47 = sbr.rel (0) target = $region25
    $region24: #{tpu_custom_call.1} parent=1 // pred_region
      %49 = dma.done [#allocation7], 1024
    $region25: #{tpu_custom_call.1} parent=1 // pred_fallthru
      _
    %p50 = scmp.eq.s32.totalorder 0, 0
    // Predicated region
    $region26: #{tpu_custom_call.1} parent=1 // pred_check
      %p51 = pneg %p50
    $region27: #{tpu_custom_call.1} parent=1 // pred_check_branch
      %53 = sbr.rel (%p51) target = $region29
    $region28: #{tpu_custom_call.1} parent=1 // pred_region
      %54 = vst [vmem:[#allocation2] sm:$0xff] 0.0
    $region29: #{tpu_custom_call.1} parent=1 // pred_fallthru
      _
    %v55 = vld [vmem:[%s0] sm:$0xff]
    %v56 = vld [vmem:[%s1] sm:$0xff]
    %v57 = vlaneseq
    %v58 = vand.u32 %v57, 127
    %s59 = smul.u32 0, 128
    %v60 = vstv %s59
    %v61 = vadd.s32 %v58, %v60
    %62 = vset.pattern.permute.xlu0 0
    %63 = vperm.xlu0 %62, %v55
    %v64 = vpop.permute.xlu0 %63
    %vm65 = vcmp.eq.s32.totalorder %v61, %v64
    %67 = vset.pattern.permute.xlu0 0
    %68 = vperm.xlu0 %67, %v56
    %v69 = vpop.permute.xlu0 %68
    %v71 = vsel %vm65, %v69, 0.0
    %v72 = vadd.f32 %v71, 0.0
    %73 = vset.pattern.permute.xlu0 1
    %74 = vperm.xlu0 %73, %v55
    %v75 = vpop.permute.xlu0 %74
    %vm76 = vcmp.eq.s32.totalorder %v61, %v75
    %77 = vset.pattern.permute.xlu0 1
    %78 = vperm.xlu0 %77, %v56
    %v79 = vpop.permute.xlu0 %78
    %v81 = vsel %vm76, %v79, 0.0
    %v82 = vadd.f32 %v72, %v81
    %83 = vset.pattern.permute.xlu0 2
    %84 = vperm.xlu0 %83, %v55
    %v85 = vpop.permute.xlu0 %84
    %vm86 = vcmp.eq.s32.totalorder %v61, %v85
    %87 = vset.pattern.permute.xlu0 2
    %88 = vperm.xlu0 %87, %v56
    %v89 = vpop.permute.xlu0 %88
    %v91 = vsel %vm86, %v89, 0.0
    %v92 = vadd.f32 %v82, %v91
    %93 = vset.pattern.permute.xlu0 3
    %94 = vperm.xlu0 %93, %v55
    %v95 = vpop.permute.xlu0 %94
    %vm96 = vcmp.eq.s32.totalorder %v61, %v95
    %97 = vset.pattern.permute.xlu0 3
    %98 = vperm.xlu0 %97, %v56
    %v99 = vpop.permute.xlu0 %98
    %v101 = vsel %vm96, %v99, 0.0
    %v102 = vadd.f32 %v92, %v101
    %v103 = vld [vmem:[#allocation2] sm:$0xff]
    %v104 = vpack.c.bf16 %v102, %v102
    %v105 = vld [vmem:[#allocation3] sm:$0xf]
    %v106 = vld [vmem:[#allocation3 + $0x4] sm:$0xf]
    %v107 = vld [vmem:[#allocation3 + $0x8] sm:$0xf]
    %v108 = vld [vmem:[#allocation3 + $0xc] sm:$0xf]
    %v109 = vld [vmem:[#allocation3 + $0x10] sm:$0xf]
    %v110 = vld [vmem:[#allocation3 + $0x14] sm:$0xf]
    %v111 = vld [vmem:[#allocation3 + $0x18] sm:$0xf]
    %v112 = vld [vmem:[#allocation3 + $0x1c] sm:$0xf]
    %v113 = vld [vmem:[#allocation3 + $0x20] sm:$0xf]
    %v114 = vld [vmem:[#allocation3 + $0x24] sm:$0xf]
    %v115 = vld [vmem:[#allocation3 + $0x28] sm:$0xf]
    %v116 = vld [vmem:[#allocation3 + $0x2c] sm:$0xf]
    %v117 = vld [vmem:[#allocation3 + $0x30] sm:$0xf]
    %v118 = vld [vmem:[#allocation3 + $0x34] sm:$0xf]
    %v119 = vld [vmem:[#allocation3 + $0x38] sm:$0xf]
    %v120 = vld [vmem:[#allocation3 + $0x3c] sm:$0xf]
    %v137 = vunpack.c.l.b16 %v105
    %v138 = vunpack.c.l.b16 %v106
    %v139 = vunpack.c.l.b16 %v107
    %v140 = vunpack.c.l.b16 %v108
    %v141 = vunpack.c.l.b16 %v109
    %v142 = vunpack.c.l.b16 %v110
    %v143 = vunpack.c.l.b16 %v111
    %v144 = vunpack.c.l.b16 %v112
    %v145 = vunpack.c.l.b16 %v113
    %v146 = vunpack.c.l.b16 %v114
    %v147 = vunpack.c.l.b16 %v115
    %v148 = vunpack.c.l.b16 %v116
    %v149 = vunpack.c.l.b16 %v117
    %v150 = vunpack.c.l.b16 %v118
    %v151 = vunpack.c.l.b16 %v119
    %v152 = vunpack.c.l.b16 %v120
    %v153 = vpack.c.b16 %v138, %v137
    %v154 = vpack.c.b16 %v140, %v139
    %v155 = vpack.c.b16 %v142, %v141
    %v156 = vpack.c.b16 %v144, %v143
    %v157 = vpack.c.b16 %v146, %v145
    %v158 = vpack.c.b16 %v148, %v147
    %v159 = vpack.c.b16 %v150, %v149
    %v160 = vpack.c.b16 %v152, %v151
    %169 = vmatpush.bf16.msra.mxu0 %v160
    %170 = vmatpush.bf16.msra.mxu0 %v159
    %171 = vmatpush.bf16.msra.mxu0 %v158
    %172 = vmatpush.bf16.msra.mxu0 %v157
    %173 = vmatpush.bf16.msra.mxu0 %v156
    %174 = vmatpush.bf16.msra.mxu0 %v155
    %175 = vmatpush.bf16.msra.mxu0 %v154
    %176 = vmatpush.bf16.msra.mxu0 %v153
    %177 = vmatmul.bf16.gmra.mxu0 %v104
    %v178 = vpop.f32.mrf.mxu0
    %v179 = vadd.f32 0.0, %v178
    %v180 = vpop.f32.mrf.mxu0
    %181 = vdwg.mxu0
    %v182 = vadd.f32 %v103, %v179
    %183 = vst [vmem:[#allocation2] sm:$0xff] %v182
    // Predicated region
    $region30: #{tpu_custom_call.1} parent=1 // pred_check
      %p184 = pneg %p50
    $region31: #{tpu_custom_call.1} parent=1 // pred_check_branch
      %186 = sbr.rel (%p184) target = $region33
    $region32: #{tpu_custom_call.1} parent=1 // pred_region
      %v187 = vld [vmem:[#allocation2] sm:$0xff]
      %v188 = vpack.c.bf16 %v187, %v187
      %v189 = vld [vmem:[#allocation6] sm:$0xf]
      %v190 = vld [vmem:[#allocation6 + $0x4] sm:$0xf]
      %v191 = vld [vmem:[#allocation6 + $0x8] sm:$0xf]
      %v192 = vld [vmem:[#allocation6 + $0xc] sm:$0xf]
      %v193 = vld [vmem:[#allocation6 + $0x10] sm:$0xf]
      %v194 = vld [vmem:[#allocation6 + $0x14] sm:$0xf]
      %v195 = vld [vmem:[#allocation6 + $0x18] sm:$0xf]
      %v196 = vld [vmem:[#allocation6 + $0x1c] sm:$0xf]
      %v197 = vld [vmem:[#allocation6 + $0x20] sm:$0xf]
      %v198 = vld [vmem:[#allocation6 + $0x24] sm:$0xf]
      %v199 = vld [vmem:[#allocation6 + $0x28] sm:$0xf]
      %v200 = vld [vmem:[#allocation6 + $0x2c] sm:$0xf]
      %v201 = vld [vmem:[#allocation6 + $0x30] sm:$0xf]
      %v202 = vld [vmem:[#allocation6 + $0x34] sm:$0xf]
      %v203 = vld [vmem:[#allocation6 + $0x38] sm:$0xf]
      %v204 = vld [vmem:[#allocation6 + $0x3c] sm:$0xf]
      %v221 = vunpack.c.l.b16 %v189
      %v222 = vunpack.c.l.b16 %v190
      %v223 = vunpack.c.l.b16 %v191
      %v224 = vunpack.c.l.b16 %v192
      %v225 = vunpack.c.l.b16 %v193
      %v226 = vunpack.c.l.b16 %v194
      %v227 = vunpack.c.l.b16 %v195
      %v228 = vunpack.c.l.b16 %v196
      %v229 = vunpack.c.l.b16 %v197
      %v230 = vunpack.c.l.b16 %v198
      %v231 = vunpack.c.l.b16 %v199
      %v232 = vunpack.c.l.b16 %v200
      %v233 = vunpack.c.l.b16 %v201
      %v234 = vunpack.c.l.b16 %v202
      %v235 = vunpack.c.l.b16 %v203
      %v236 = vunpack.c.l.b16 %v204
      %v237 = vpack.c.b16 %v222, %v221
      %v238 = vpack.c.b16 %v224, %v223
      %v239 = vpack.c.b16 %v226, %v225
      %v240 = vpack.c.b16 %v228, %v227
      %v241 = vpack.c.b16 %v230, %v229
      %v242 = vpack.c.b16 %v232, %v231
      %v243 = vpack.c.b16 %v234, %v233
      %v244 = vpack.c.b16 %v236, %v235
      %253 = vmatpush.bf16.msra.mxu0 %v244
      %254 = vmatpush.bf16.msra.mxu0 %v243
      %255 = vmatpush.bf16.msra.mxu0 %v242
      %256 = vmatpush.bf16.msra.mxu0 %v241
      %257 = vmatpush.bf16.msra.mxu0 %v240
      %258 = vmatpush.bf16.msra.mxu0 %v239
      %259 = vmatpush.bf16.msra.mxu0 %v238
      %260 = vmatpush.bf16.msra.mxu0 %v237
      %261 = vmatmul.bf16.gmra.mxu0 %v188
      %v262 = vpop.f32.mrf.mxu0
      %v263 = vadd.f32 0.0, %v262
      %v264 = vpop.f32.mrf.mxu0
      %265 = vdwg.mxu0
      %266 = vst [vmem:[#allocation8] sm:$0xff] %v263
    $region33: #{tpu_custom_call.1} parent=1 // pred_fallthru
      _
    // Predicated region
    $region34: #{tpu_custom_call.1} parent=1 // pred_check
      _
    $region35: #{tpu_custom_call.1} parent=1 // pred_check_branch
      %268 = sbr.rel (0) target = $region37
    $region36: #{tpu_custom_call.1} parent=1 // pred_region
      %270 = vsyncadd [#allocation5], 0
      %s272 = sshll.u32 [#allocation8], 4
      %s273 = int_to_ptr.vmem [resolvable:$true] %s272
      %s274 = sshll.u32 %s4, 4
      %s275 = int_to_ptr.hbm [resolvable:$true] %s274
      %277 = dma.vmem_to_hbm [thread:$0]  %s273, 128, %s275, [#allocation5]
    $region37: #{tpu_custom_call.1} parent=1 // pred_fallthru
      _
    // Predicated region
    $region38: #{tpu_custom_call.1} parent=1 // pred_check
      _
    $region39: #{tpu_custom_call.1} parent=1 // pred_check_branch
      %279 = sbr.rel (0) target = $region41
    $region40: #{tpu_custom_call.1} parent=1 // pred_region
      %281 = dma.done [#allocation5], 128
    $region41: #{tpu_custom_call.1} parent=1 // pred_fallthru
      _
    %282 = vsyncpa [#allocation4], 1
    %283 = vsyncpa [#allocation7], 1
    %284 = vsyncpa [#allocation5], 1

</llo_original>
